<compile_context>
chip_gen: v5e
topology: v5e:2x2
jax: 0.10.0
libtpu: 0.0.40
codegen_flags: <defaults>
</compile_context>

<pallas_src>
import functools

import jax
import jax.numpy as jnp
from jax.experimental import pallas as pl
from jax.experimental.pallas import tpu as pltpu


def _gridding_kernel(kern_ref, ksp_ref, out_ref, *, n_meas):
    # kern_ref: (1, M, th, WR)      -- precomputed (a/M)-scaled sinc kernel.
    # ksp_ref:  (1, Ct, M, th, WR)  -- k-space samples (real/imag merged in WR).
    # out_ref:  (1, Ct, th, WR)
    kern = kern_ref[0].astype(jnp.float32)                      # (M, th, WR)
    acc = ksp_ref[0, :, 0].astype(jnp.float32) * kern[0][None]  # (Ct, th, WR)
    for m in range(1, n_meas):                                  # M small & static
        acc = acc + ksp_ref[0, :, m].astype(jnp.float32) * kern[m][None]
    # TODO(synk): on v5e, chunk the accumulation over Ct/th sub-slabs so acc
    # stays vreg-resident (removes the acc reload/writeback per m term).
    out_ref[0] = acc.astype(out_ref.dtype)


def _vmem_budget():
    """Per-generation (tile_footprint_budget, vmem_limit_bytes)."""
    try:
        cap = int(pltpu.get_tpu_info().vmem_capacity_bytes)
    except Exception:
        cap = 64 << 20  # conservative fallback (v7x per-TC capacity)
    if cap <= (64 << 20):            # v7x-class: 64 MiB per TensorCore
        return 44 << 20, 48 << 20
    return 80 << 20, 96 << 20        # v5e / v6e: 128 MiB per TensorCore


def _pick_tiles(B, C, M, H, WR, ksp_itemsize, kern_itemsize, budget_bytes,
                min_steps=8):
    """Pick (th, ct): largest double-buffered footprint that fits budget_bytes,
    preferring configurations with at least `min_steps` pipeline steps."""
    th_cands = sorted({d for d in range(1, H + 1)
                       if H % d == 0 and (d % 8 == 0 or d == H)})
    ct_cands = [d for d in range(1, C + 1) if C % d == 0]

    def footprint(th, ct):
        ksp = ct * M * th * WR * ksp_itemsize
        kern = M * th * WR * kern_itemsize
        out = ct * th * WR * ksp_itemsize
        # All blocks double-buffered (conservative; kern could be Buffered(1)).
        return 2 * (ksp + kern + out)

    best = (th_cands[0], 1)
    best_key = (False, -1, 0)
    for th in th_cands:
        for ct in ct_cands:
            if footprint(th, ct) > budget_bytes:
                continue
            steps = B * (H // th) * (C // ct)
            block_bytes = ct * M * th * WR * ksp_itemsize
            key = (steps >= min_steps, block_bytes, -steps)
            if key > best_key:
                best_key = key
                best = (th, ct)
    # TODO(synk): for extreme M*W*R where even (th=8, ct=1) exceeds the budget,
    # also tile the M (or W) axis.
    return best


@functools.partial(jax.jit, static_argnames=("eps",))
def gridding_forward(ksp_ri, loc_xy, a_param, b_param, eps=1e-4):
    """ksp_ri: (B, C, M, H, W, R); loc_xy: (B, M, H, W, 2);
       a_param: (H, W); b_param: (H, W, 2). Returns (B, C, H, W, R)."""
    B, C, M, H, W, R = ksp_ri.shape
    WR = W * R
    dtype = ksp_ri.dtype
    ksp_itemsize = jnp.dtype(dtype).itemsize

    # Free reshape: merge (W, R) into one lane-dense trailing dim.
    ksp = ksp_ri.reshape(B, C, M, H, WR)

    # --- Precompute the fully-scaled sinc kernel in the wrapper (cheap, one
    # (B, M, H, WR) side stream instead of loc_x/loc_y/b0/b1/a). ------------
    loc = loc_xy.astype(jnp.float32) + eps
    x = loc[..., 0]                                        # (B, M, H, W)
    y = loc[..., 1]
    b0 = b_param[..., 0].astype(jnp.float32)               # (H, W)
    b1 = b_param[..., 1].astype(jnp.float32)
    mag = jnp.pi * jnp.sqrt((b0 * x) ** 2 + (b1 * y) ** 2)
    # Note: no sinc(0) guard, matching the PyTorch reference (sin(0)/0 -> NaN).
    kern = jnp.sin(mag) / mag                              # (B, M, H, W)
    # Fold the density-comp weight `a` and the 1/M of the mean in once, so the
    # in-kernel hot loop is a pure MAC over ksp.
    kern = kern * (a_param.astype(jnp.float32) * (1.0 / M))[None, None, :, :]
    kern_wr = jnp.repeat(kern, R, axis=-1).astype(dtype)   # (B, M, H, WR)
    kern_itemsize = jnp.dtype(kern_wr.dtype).itemsize

    # --- Tiling / VMEM budgeting (per TPU generation). -----------------------
    budget_bytes, vmem_limit = _vmem_budget()
    th, ct = _pick_tiles(B, C, M, H, WR, ksp_itemsize, kern_itemsize,
                         budget_bytes)

    # TODO(synk): if a real workload has W*R < 128, fold H into the trailing
    # dim instead so output stores stay unmasked (lane-dense).

    kernel = functools.partial(_gridding_kernel, n_meas=M)

    cost = pl.CostEstimate(
        flops=2 * B * C * M * H * WR,
        transcendentals=0,
        bytes_accessed=(ksp.size + B * C * H * WR) * ksp_itemsize
        + kern_wr.size * kern_itemsize,
    )

    out = pl.pallas_call(
        kernel,
        out_shape=jax.ShapeDtypeStruct((B, C, H, WR), dtype),
        grid_spec=pltpu.PrefetchScalarGridSpec(
            num_scalar_prefetch=0,
            grid=(B, H // th, C // ct),
            in_specs=[
                # kern block only changes with (b, h); C is innermost so its
                # DMA is skipped on most steps.
                pl.BlockSpec((1, M, th, WR), lambda b, h, c: (b, 0, h, 0)),
                pl.BlockSpec((1, ct, M, th, WR),
                             lambda b, h, c: (b, c, 0, h, 0)),
            ],
            out_specs=pl.BlockSpec((1, ct, th, WR),
                                   lambda b, h, c: (b, c, h, 0)),
        ),
        compiler_params=pltpu.CompilerParams(
            # All grid points write disjoint output blocks and share no state,
            # so every axis is safe to shard across v7x's two TensorCores.
            dimension_semantics=("parallel", "parallel", "parallel"),
            vmem_limit_bytes=vmem_limit,
        ),
        cost_estimate=cost,
    )(kern_wr, ksp)

    # Free reshape back to the PyTorch output layout (B, C, H, W, R).
    return out.reshape(B, C, H, W, R)


def init_gridding_params(H, W, dtype=jnp.float32):
    """Deterministic init matching reset_density_comp_params / reset_kernel_params."""
    ii = jnp.arange(H, dtype=dtype)[:, None] - (H // 2)
    jj = jnp.arange(W, dtype=dtype)[None, :] - (W // 2)
    r = jnp.sqrt(ii ** 2 + jj ** 2)
    a = 0.025 * r + 0.125                                  # (H, W)
    b_plane = 0.005 * r + 0.05
    b = jnp.stack([b_plane, b_plane], axis=-1)             # (H, W, 2)
    return a, b


def _reference(ksp_ri, loc_xy, a, b, eps):
    loc = loc_xy + eps
    x = loc[..., 0]
    y = loc[..., 1]
    mag = jnp.pi * jnp.sqrt((b[..., 0] * x) ** 2 + (b[..., 1] * y) ** 2)
    kern = jnp.sin(mag) / mag                              # (B, M, H, W)
    prod = ksp_ri * kern[:, None, :, :, :, None]           # (B, C, M, H, W, R)
    return a[None, None, :, :, None] * jnp.mean(prod, axis=2)


if __name__ == "__main__":
    # Small shapes consistent with the module:
    # Ksp_ri: (B, C, M, H, W, R), Loc_xy: (B, M, H, W, 2), kernel_mat_size = (H, W).
    B, C, M, H, W, R = 2, 2, 4, 8, 128, 2
    eps = 1e-4

    key = jax.random.PRNGKey(0)
    k1, k2 = jax.random.split(key)
    ksp_ri = jax.random.normal(k1, (B, C, M, H, W, R), dtype=jnp.float32)
    loc_xy = jax.random.uniform(k2, (B, M, H, W, 2), dtype=jnp.float32,
                                minval=-0.5, maxval=0.5)

    a_param, b_param = init_gridding_params(H, W)

    out = gridding_forward(ksp_ri, loc_xy, a_param, b_param, eps=eps)
    out = jax.block_until_ready(out)

    ref = _reference(ksp_ri, loc_xy, a_param, b_param, eps)
    assert out.shape == (B, C, H, W, R)
    assert jnp.allclose(out, ref, atol=1e-5, rtol=1e-5), float(
        jnp.max(jnp.abs(out - ref)))

    print("KERNEL_OK")
</pallas_src>

<mosaic_0001>
module attributes {stable_mosaic.version = 11 : i64} {
  func.func @_gridding_kernel(%arg0: i32, %arg1: i32, %arg2: i32, %arg3: memref<1x4x8x256xf32, #tpu.memory_space<vmem>>, %arg4: memref<1x2x4x8x256xf32, #tpu.memory_space<vmem>>, %arg5: memref<1x2x8x256xf32, #tpu.memory_space<vmem>>) attributes {dimension_semantics = [#tpu.dimension_semantics<parallel>, #tpu.dimension_semantics<parallel>, #tpu.dimension_semantics<parallel>], iteration_bounds = array<i64: 2, 1, 1>, scalar_prefetch = 0 : i64, scratch_operands = 0 : i64, tpu.core_type = #tpu.core_type<tc>, window_params = [{transform_indices = @transform_0, window_bounds = array<i64: 1, 4, 8, 256>}, {transform_indices = @transform_1, window_bounds = array<i64: 1, 2, 4, 8, 256>}, {transform_indices = @transform_2, window_bounds = array<i64: 1, 2, 8, 256>}]} {
    %c0 = arith.constant 0 : index
    %c0_0 = arith.constant 0 : index
    %c0_1 = arith.constant 0 : index
    %c0_2 = arith.constant 0 : index
    %0 = vector.load %arg3[%c0, %c0_0, %c0_1, %c0_2] : memref<1x4x8x256xf32, #tpu.memory_space<vmem>>, vector<1x4x8x256xf32>
    %1 = vector.shape_cast %0 : vector<1x4x8x256xf32> to vector<4x8x256xf32>
    %c0_3 = arith.constant 0 : index
    %c0_4 = arith.constant 0 : index
    %c0_5 = arith.constant 0 : index
    %c0_6 = arith.constant 0 : index
    %c0_7 = arith.constant 0 : index
    %2 = vector.load %arg4[%c0_3, %c0_4, %c0_5, %c0_6, %c0_7] : memref<1x2x4x8x256xf32, #tpu.memory_space<vmem>>, vector<1x2x1x8x256xf32>
    %3 = vector.shape_cast %2 : vector<1x2x1x8x256xf32> to vector<2x8x256xf32>
    %4 = vector.extract_strided_slice %1 {offsets = [0, 0, 0], sizes = [1, 8, 256], strides = [1, 1, 1]} : vector<4x8x256xf32> to vector<1x8x256xf32>
    %5 = vector.shape_cast %4 : vector<1x8x256xf32> to vector<8x256xf32>
    %6 = vector.shape_cast %5 : vector<8x256xf32> to vector<1x8x256xf32>
    %7 = vector.broadcast %6 : vector<1x8x256xf32> to vector<2x8x256xf32>
    %8 = arith.mulf %3, %7 : vector<2x8x256xf32>
    %c0_8 = arith.constant 0 : index
    %c0_9 = arith.constant 0 : index
    %c1 = arith.constant 1 : index
    %c0_10 = arith.constant 0 : index
    %c0_11 = arith.constant 0 : index
    %9 = vector.load %arg4[%c0_8, %c0_9, %c1, %c0_10, %c0_11] : memref<1x2x4x8x256xf32, #tpu.memory_space<vmem>>, vector<1x2x1x8x256xf32>
    %10 = vector.shape_cast %9 : vector<1x2x1x8x256xf32> to vector<2x8x256xf32>
    %11 = vector.extract_strided_slice %1 {offsets = [1, 0, 0], sizes = [1, 8, 256], strides = [1, 1, 1]} : vector<4x8x256xf32> to vector<1x8x256xf32>
    %12 = vector.shape_cast %11 : vector<1x8x256xf32> to vector<8x256xf32>
    %13 = vector.shape_cast %12 : vector<8x256xf32> to vector<1x8x256xf32>
    %14 = vector.broadcast %13 : vector<1x8x256xf32> to vector<2x8x256xf32>
    %15 = arith.mulf %10, %14 : vector<2x8x256xf32>
    %16 = arith.addf %8, %15 : vector<2x8x256xf32>
    %c0_12 = arith.constant 0 : index
    %c0_13 = arith.constant 0 : index
    %c2 = arith.constant 2 : index
    %c0_14 = arith.constant 0 : index
    %c0_15 = arith.constant 0 : index
    %17 = vector.load %arg4[%c0_12, %c0_13, %c2, %c0_14, %c0_15] : memref<1x2x4x8x256xf32, #tpu.memory_space<vmem>>, vector<1x2x1x8x256xf32>
    %18 = vector.shape_cast %17 : vector<1x2x1x8x256xf32> to vector<2x8x256xf32>
    %19 = vector.extract_strided_slice %1 {offsets = [2, 0, 0], sizes = [1, 8, 256], strides = [1, 1, 1]} : vector<4x8x256xf32> to vector<1x8x256xf32>
    %20 = vector.shape_cast %19 : vector<1x8x256xf32> to vector<8x256xf32>
    %21 = vector.shape_cast %20 : vector<8x256xf32> to vector<1x8x256xf32>
    %22 = vector.broadcast %21 : vector<1x8x256xf32> to vector<2x8x256xf32>
    %23 = arith.mulf %18, %22 : vector<2x8x256xf32>
    %24 = arith.addf %16, %23 : vector<2x8x256xf32>
    %c0_16 = arith.constant 0 : index
    %c0_17 = arith.constant 0 : index
    %c3 = arith.constant 3 : index
    %c0_18 = arith.constant 0 : index
    %c0_19 = arith.constant 0 : index
    %25 = vector.load %arg4[%c0_16, %c0_17, %c3, %c0_18, %c0_19] : memref<1x2x4x8x256xf32, #tpu.memory_space<vmem>>, vector<1x2x1x8x256xf32>
    %26 = vector.shape_cast %25 : vector<1x2x1x8x256xf32> to vector<2x8x256xf32>
    %27 = vector.extract_strided_slice %1 {offsets = [3, 0, 0], sizes = [1, 8, 256], strides = [1, 1, 1]} : vector<4x8x256xf32> to vector<1x8x256xf32>
    %28 = vector.shape_cast %27 : vector<1x8x256xf32> to vector<8x256xf32>
    %29 = vector.shape_cast %28 : vector<8x256xf32> to vector<1x8x256xf32>
    %30 = vector.broadcast %29 : vector<1x8x256xf32> to vector<2x8x256xf32>
    %31 = arith.mulf %26, %30 : vector<2x8x256xf32>
    %32 = arith.addf %24, %31 : vector<2x8x256xf32>
    %c0_20 = arith.constant 0 : index
    %c0_21 = arith.constant 0 : index
    %c0_22 = arith.constant 0 : index
    %c0_23 = arith.constant 0 : index
    %33 = vector.load %arg5[%c0_20, %c0_21, %c0_22, %c0_23] : memref<1x2x8x256xf32, #tpu.memory_space<vmem>>, vector<1x2x8x256xf32>
    %34 = vector.shape_cast %33 : vector<1x2x8x256xf32> to vector<2x8x256xf32>
    %35 = vector.shape_cast %32 : vector<2x8x256xf32> to vector<1x2x8x256xf32>
    tpu.vector_store %arg5[%c0_20, %c0_21, %c0_22, %c0_23], %35 {strides = array<i32>} : memref<1x2x8x256xf32, #tpu.memory_space<vmem>>, vector<1x2x8x256xf32>,
    return
  }
  func.func @transform_0(%arg0: i32, %arg1: i32, %arg2: i32) -> (i32, i32, i32, i32) {
    %c0_i32 = arith.constant 0 : i32
    %c0_i32_0 = arith.constant 0 : i32
    %c0_i32_1 = arith.constant 0 : i32
    return %arg0, %c0_i32, %arg1, %c0_i32_0 : i32, i32, i32, i32
  }
  func.func @transform_1(%arg0: i32, %arg1: i32, %arg2: i32) -> (i32, i32, i32, i32, i32) {
    %c0_i32 = arith.constant 0 : i32
    %c0_i32_0 = arith.constant 0 : i32
    %c0_i32_1 = arith.constant 0 : i32
    return %arg0, %arg2, %c0_i32, %arg1, %c0_i32_0 : i32, i32, i32, i32, i32
  }
  func.func @transform_2(%arg0: i32, %arg1: i32, %arg2: i32) -> (i32, i32, i32, i32) {
    %c0_i32 = arith.constant 0 : i32
    %c0_i32_0 = arith.constant 0 : i32
    return %arg0, %arg2, %arg1, %c0_i32 : i32, i32, i32, i32
  }
}

</mosaic_0001>

<llo_original>
// kernel: gridding_forward.1
$region0: #{gridding_forward.1}
  #allocation0 [shape = 'u32[]', space=smem, size = 0x4, offset = 0x4, fixed_abs, tag = 'smem constant byte address 0x4 - core index']
  #allocation1 [shape = 'u32[72,128]{1,0:T(1,128)}', space=vmem, size = 0x9000, scoped, tag = 'internal scratch']
  %s0 = inlined_call_operand.vmem [shape: f32[2,4,8,256], index: 0, kind: input, shape index: {}]
  %s1 = inlined_call_operand.vmem [shape: f32[2,2,4,8,256], index: 1, kind: input, shape index: {}]
  %s2 = inlined_call_operand.vmem [shape: f32[2,2,8,256], index: 2, kind: output, shape index: {}]
  %s3 = sld [smem:[#allocation0]]
  $region41: #{gridding_forward.1} parent=0
    _
  %s5 = ssub.s32 1, %s3
  %s6 = scalar_select 0, %s5, %s3
  loop: start=0, step=1, limit=4
  $region2: #{gridding_forward.1} parent=0 // loop_pre_header
    _
  $region3: #{gridding_forward.1} parent=0 // loop_header
    %s8 = sphi 0, %s12
    %p9 = scmp.ge.s32.totalorder %s8, 4
    %s15 = sphi 0, %s34
    %s16 = sphi 0, %s30
    %s17 = sphi 0, %s26
    %s18 = sphi 0, %s15
    %s19 = sphi 0, %s16
    %s20 = sphi 0, %s17
    %s21 = sphi 0, %s18
    %s22 = sphi 0, %s19
    %s23 = sphi 0, %s20
    %s39 = sphi 0, %s41
    %s42 = sphi 0, %s39
    %s43 = sphi 0, %s42
    %s59 = sphi 0, %s43
    %s69 = sphi 0, %s71
    %s72 = sphi 0, %s69
    %s73 = sphi 0, %s72
    %s89 = sphi 0, %s73
    %s99 = sphi 0, %s101
    %s102 = sphi 0, %s99
    %s103 = sphi 0, %s102
    %s119 = sphi 0, %s103
  $region4: #{gridding_forward.1} parent=0 // loop_header_branch
    %11 = sbr.rel (%p9) target = $region8
  $region5: #{gridding_forward.1} parent=0 // loop_body
    %s13 = ssub.s32 %s8, 1
    %s14 = ssub.s32 %s8, 2
    %s24 = sadd.s32 1, %s17
    %p25 = scmp.ge.s32.totalorder %s24, 1
    %s26 = scalar_select %p25, 0, %s24
    %s27 = sadd.s32 1, %s16
    %s28 = scalar_select %p25, %s27, %s16
    %p29 = scmp.ge.s32.totalorder %s28, 1
    %s30 = scalar_select %p29, 0, %s28
    %s31 = sadd.s32 1, %s15
    %s32 = scalar_select %p29, %s31, %s15
    %p33 = scmp.ge.s32.totalorder %s32, 2
    %s34 = scalar_select %p33, 0, %s32
    %s35 = ssub.s32 %s15, %s34
    %s36 = ssub.s32 %s16, %s30
    %s37 = sor.u32 %s35, %s36
    %p38 = scmp.eq.s32.totalorder %s37, 0
    %s40 = sadd.s32 %s39, 1
    %s41 = scalar_select %p38, %s39, %s40
    %p44 = pneg %p38
    %p45 = scmp.eq.s32.totalorder %s8, 1
    %p46 = por %p44, %p45
    %p47 = scmp.ne.s32.totalorder %s39, %s42
    %p48 = scmp.eq.s32.totalorder %s8, 0
    %p49 = por %p47, %p48
    %p50 = scmp.ne.s32.totalorder %s39, %s42
    %p51 = scmp.eq.s32.totalorder %s13, 1
    %p52 = por %p50, %p51
    %p53 = scmp.ne.s32.totalorder %s42, %s43
    %p54 = scmp.eq.s32.totalorder %s13, 0
    %p55 = por %p53, %p54
    %p56 = scmp.ne.s32.totalorder %s42, %s43
    %p57 = scmp.eq.s32.totalorder %s14, 1
    %p58 = por %p56, %p57
    %p60 = scmp.ne.s32.totalorder %s43, %s59
    %p61 = scmp.eq.s32.totalorder %s14, 0
    %p62 = por %p60, %p61
    %s63 = ssub.s32 %s15, %s34
    %s64 = ssub.s32 %s17, %s26
    %s65 = sor.u32 %s63, %s64
    %s66 = ssub.s32 %s16, %s30
    %s67 = sor.u32 %s65, %s66
    %p68 = scmp.eq.s32.totalorder %s67, 0
    %s70 = sadd.s32 %s69, 1
    %s71 = scalar_select %p68, %s69, %s70
    %p74 = pneg %p68
    %p75 = scmp.eq.s32.totalorder %s8, 1
    %p76 = por %p74, %p75
    %p77 = scmp.ne.s32.totalorder %s69, %s72
    %p78 = scmp.eq.s32.totalorder %s8, 0
    %p79 = por %p77, %p78
    %p80 = scmp.ne.s32.totalorder %s69, %s72
    %p81 = scmp.eq.s32.totalorder %s13, 1
    %p82 = por %p80, %p81
    %p83 = scmp.ne.s32.totalorder %s72, %s73
    %p84 = scmp.eq.s32.totalorder %s13, 0
    %p85 = por %p83, %p84
    %p86 = scmp.ne.s32.totalorder %s72, %s73
    %p87 = scmp.eq.s32.totalorder %s14, 1
    %p88 = por %p86, %p87
    %p90 = scmp.ne.s32.totalorder %s73, %s89
    %p91 = scmp.eq.s32.totalorder %s14, 0
    %p92 = por %p90, %p91
    %s93 = ssub.s32 %s15, %s34
    %s94 = ssub.s32 %s17, %s26
    %s95 = sor.u32 %s93, %s94
    %s96 = ssub.s32 %s16, %s30
    %s97 = sor.u32 %s95, %s96
    %p98 = scmp.eq.s32.totalorder %s97, 0
    %s100 = sadd.s32 %s99, 1
    %s101 = scalar_select %p98, %s99, %s100
    %p104 = pneg %p98
    %p105 = scmp.eq.s32.totalorder %s8, 1
    %p106 = por %p104, %p105
    %p107 = scmp.ne.s32.totalorder %s99, %s102
    %p108 = scmp.eq.s32.totalorder %s8, 0
    %p109 = por %p107, %p108
    %p110 = scmp.ne.s32.totalorder %s99, %s102
    %p111 = scmp.eq.s32.totalorder %s13, 1
    %p112 = por %p110, %p111
    %p113 = scmp.ne.s32.totalorder %s102, %s103
    %p114 = scmp.eq.s32.totalorder %s13, 0
    %p115 = por %p113, %p114
    %p116 = scmp.ne.s32.totalorder %s102, %s103
    %p117 = scmp.eq.s32.totalorder %s14, 1
    %p118 = por %p116, %p117
    %p120 = scmp.ne.s32.totalorder %s103, %s119
    %p121 = scmp.eq.s32.totalorder %s14, 0
    %p122 = por %p120, %p121
    %p123 = scmp.le.s32.totalorder 1, %s8
    %p124 = scmp.lt.s32.totalorder %s8, 3
    %p125 = pnand %p123, %p124
    %p126 = pneg %p125
    // Predicated region
    $region9: #{gridding_forward.1} parent=5 // pred_check
      _
    $region10: #{gridding_forward.1} parent=5 // pred_check_branch
      %128 = sbr.rel (%p125) target = $region12
    $region11: #{gridding_forward.1} parent=5 // pred_region
      %s129 = ssub.s32 %s8, 1
    $region12: #{gridding_forward.1} parent=5 // pred_fallthru
      _
    %p130 = scmp.lt.s32.totalorder %s8, 2
    // Predicated region
    $region13: #{gridding_forward.1} parent=5 // pred_check
      %p131 = pneg %p130
    $region14: #{gridding_forward.1} parent=5 // pred_check_branch
      %133 = sbr.rel (%p131) target = $region16
    $region15: #{gridding_forward.1} parent=5 // pred_region
      // Predicated region
      $region17: #{gridding_forward.1} parent=15 // pred_check
        %p134 = pneg %p49
      $region18: #{gridding_forward.1} parent=15 // pred_check_branch
        %136 = sbr.rel (%p134) target = $region20
      $region19: #{gridding_forward.1} parent=15 // pred_region
        %p137 = scmp.lt.s32.totalorder %s15, 1
        %s138 = scalar_select %p137, %s15, 1
        %p139 = scmp.lt.s32.totalorder %s16, 0
        %s140 = scalar_select %p139, %s16, 0
        %s141 = smul.addr %s140, 2
        %s142 = smul.addr %s138, 8
        %s143 = sadd.s32 %s141, %s142
        %s144 = smul.addr %s143, 8
        %s145 = scalar_lea.vmem %s0, %s144
      $region20: #{gridding_forward.1} parent=15 // pred_fallthru
        _
      // Predicated region
      $region21: #{gridding_forward.1} parent=15 // pred_check
        %p146 = pneg %p79
      $region22: #{gridding_forward.1} parent=15 // pred_check_branch
        %148 = sbr.rel (%p146) target = $region24
      $region23: #{gridding_forward.1} parent=15 // pred_region
        %s149 = smul.u32 2, %s17
        %p150 = scmp.lt.s32.totalorder %s15, 1
        %s151 = scalar_select %p150, %s15, 1
        %p152 = scmp.lt.s32.totalorder %s149, 1
        %s153 = scalar_select %p152, %s149, 1
        %p154 = scmp.lt.s32.totalorder %s16, 0
        %s155 = scalar_select %p154, %s16, 0
        %s156 = smul.addr %s155, 2
        %s157 = smul.addr %s153, 8
        %s158 = sadd.s32 %s156, %s157
        %s159 = smul.addr %s151, 16
        %s160 = sadd.s32 %s158, %s159
        %s161 = smul.addr %s160, 8
        %s162 = scalar_lea.vmem %s1, %s161
        %s163 = smul.u32 2, %s17
      $region24: #{gridding_forward.1} parent=15 // pred_fallthru
        _
    $region16: #{gridding_forward.1} parent=5 // pred_fallthru
      _
    %p164 = scmp.le.s32.totalorder 1, %s8
    %p165 = scmp.lt.s32.totalorder %s8, 3
    %p166 = pnand %p164, %p165
    %p167 = pneg %p166
    // Predicated region
    $region25: #{gridding_forward.1} parent=5 // pred_check
      _
    $region26: #{gridding_forward.1} parent=5 // pred_check_branch
      %169 = sbr.rel (%p166) target = $region28
    $region27: #{gridding_forward.1} parent=5 // pred_region
      %s170 = ssub.s32 %s8, 1
      %p171 = scmp.lt.s32.totalorder %s18, 1
      %s172 = scalar_select %p171, %s18, 1
      %p173 = scmp.lt.s32.totalorder %s19, 0
      %s174 = scalar_select %p173, %s19, 0
      %s175 = smul.addr %s174, 2
      %s176 = smul.addr %s172, 8
      %s177 = sadd.s32 %s175, %s176
      %s178 = smul.addr %s177, 8
      %s179 = scalar_lea.vmem %s0, %s178
      %p180 = pneg %p55
      %p181 = pneg %p52
      %s182 = smul.u32 2, %s20
      %p183 = scmp.lt.s32.totalorder %s18, 1
      %s184 = scalar_select %p183, %s18, 1
      %p185 = scmp.lt.s32.totalorder %s182, 1
      %s186 = scalar_select %p185, %s182, 1
      %p187 = scmp.lt.s32.totalorder %s19, 0
      %s188 = scalar_select %p187, %s19, 0
      %s189 = smul.addr %s188, 2
      %s190 = smul.addr %s186, 8
      %s191 = sadd.s32 %s189, %s190
      %s192 = smul.addr %s184, 16
      %s193 = sadd.s32 %s191, %s192
      %s194 = smul.addr %s193, 8
      %s195 = scalar_lea.vmem %s1, %s194
      %p196 = pneg %p85
      %p197 = pneg %p82
      %p198 = pneg %p115
      %p199 = pneg %p112
      %s200 = smul.u32 2, %s20
      %p201 = scmp.lt.s32.totalorder %s18, 1
      %s202 = scalar_select %p201, %s18, 1
      %p203 = scmp.lt.s32.totalorder %s200, 1
      %s204 = scalar_select %p203, %s200, 1
      %p205 = scmp.lt.s32.totalorder %s19, 0
      %s206 = scalar_select %p205, %s19, 0
      %s207 = smul.addr %s206, 2
      %s208 = smul.addr %s204, 2
      %s209 = sadd.s32 %s207, %s208
      %s210 = smul.addr %s202, 4
      %s211 = sadd.s32 %s209, %s210
      %s212 = smul.addr %s211, 8
      %s213 = scalar_lea.vmem %s2, %s212
      %p214 = scmp.lt.s32.totalorder %s18, 1
      %s215 = scalar_select %p214, %s18, 1
      %p216 = scmp.lt.s32.totalorder %s19, 0
      %s217 = scalar_select %p216, %s19, 0
      %s218 = smul.addr %s217, 2
      %s219 = smul.addr %s215, 8
      %s220 = sadd.s32 %s218, %s219
      %s221 = smul.addr %s220, 8
      %s222 = scalar_lea.vmem %s0, %s221
      %s223 = smul.u32 2, %s20
      %p224 = scmp.lt.s32.totalorder %s18, 1
      %s225 = scalar_select %p224, %s18, 1
      %p226 = scmp.lt.s32.totalorder %s223, 1
      %s227 = scalar_select %p226, %s223, 1
      %p228 = scmp.lt.s32.totalorder %s19, 0
      %s229 = scalar_select %p228, %s19, 0
      %s230 = smul.addr %s229, 2
      %s231 = smul.addr %s227, 8
      %s232 = sadd.s32 %s230, %s231
      %s233 = smul.addr %s225, 16
      %s234 = sadd.s32 %s232, %s233
      %s235 = smul.addr %s234, 8
      %s236 = scalar_lea.vmem %s1, %s235
      %s237 = smul.u32 2, %s20
      %s238 = smul.u32 2, %s20
      %p239 = scmp.lt.s32.totalorder %s18, 1
      %s240 = scalar_select %p239, %s18, 1
      %p241 = scmp.lt.s32.totalorder %s238, 1
      %s242 = scalar_select %p241, %s238, 1
      %p243 = scmp.lt.s32.totalorder %s19, 0
      %s244 = scalar_select %p243, %s19, 0
      %s245 = smul.addr %s244, 2
      %s246 = smul.addr %s242, 2
      %s247 = sadd.s32 %s245, %s246
      %s248 = smul.addr %s240, 4
      %s249 = sadd.s32 %s247, %s248
      %s250 = smul.addr %s249, 8
      %s251 = scalar_lea.vmem %s2, %s250
      %s252 = smul.u32 2, %s20
      %v253 = vld [vmem:[%s222] sm:$0xff]
      %v254 = vld [vmem:[%s222 + $0x8] sm:$0xff]
      %v255 = vld [vmem:[%s222 + $0x10] sm:$0xff]
      %v256 = vld [vmem:[%s222 + $0x18] sm:$0xff]
      %v257 = vld [vmem:[%s222 + $0x20] sm:$0xff]
      %v258 = vld [vmem:[%s222 + $0x28] sm:$0xff]
      %v259 = vld [vmem:[%s222 + $0x30] sm:$0xff]
      %v260 = vld [vmem:[%s222 + $0x38] sm:$0xff]
      %v261 = vld [vmem:[%s236] sm:$0xff]
      %v262 = vld [vmem:[%s236 + $0x8] sm:$0xff]
      %v263 = vld [vmem:[%s236 + $0x40] sm:$0xff]
      %v264 = vld [vmem:[%s236 + $0x48] sm:$0xff]
      %v265 = vmul.f32 %v261, %v253
      %v266 = vmul.f32 %v262, %v254
      %v267 = vmul.f32 %v263, %v253
      %v268 = vmul.f32 %v264, %v254
      %s269 = scalar_lea.vmem %s236, 16
      %v270 = vld [vmem:[%s269] sm:$0xff]
      %v271 = vld [vmem:[%s269 + $0x8] sm:$0xff]
      %v272 = vld [vmem:[%s269 + $0x40] sm:$0xff]
      %v273 = vld [vmem:[%s269 + $0x48] sm:$0xff]
      %v274 = vmul.f32 %v270, %v255
      %v275 = vmul.f32 %v271, %v256
      %v276 = vmul.f32 %v272, %v255
      %v277 = vmul.f32 %v273, %v256
      %v278 = vadd.f32 %v265, %v274
      %v279 = vadd.f32 %v266, %v275
      %v280 = vadd.f32 %v267, %v276
      %v281 = vadd.f32 %v268, %v277
      %s282 = scalar_lea.vmem %s236, 32
      %v283 = vld [vmem:[%s282] sm:$0xff]
      %v284 = vld [vmem:[%s282 + $0x8] sm:$0xff]
      %v285 = vld [vmem:[%s282 + $0x40] sm:$0xff]
      %v286 = vld [vmem:[%s282 + $0x48] sm:$0xff]
      %v287 = vmul.f32 %v283, %v257
      %v288 = vmul.f32 %v284, %v258
      %v289 = vmul.f32 %v285, %v257
      %v290 = vmul.f32 %v286, %v258
      %v291 = vadd.f32 %v278, %v287
      %v292 = vadd.f32 %v279, %v288
      %v293 = vadd.f32 %v280, %v289
      %v294 = vadd.f32 %v281, %v290
      %s295 = scalar_lea.vmem %s236, 48
      %v296 = vld [vmem:[%s295] sm:$0xff]
      %v297 = vld [vmem:[%s295 + $0x8] sm:$0xff]
      %v298 = vld [vmem:[%s295 + $0x40] sm:$0xff]
      %v299 = vld [vmem:[%s295 + $0x48] sm:$0xff]
      %v300 = vmul.f32 %v296, %v259
      %v301 = vmul.f32 %v297, %v260
      %v302 = vmul.f32 %v298, %v259
      %v303 = vmul.f32 %v299, %v260
      %v304 = vadd.f32 %v291, %v300
      %v305 = vadd.f32 %v292, %v301
      %v306 = vadd.f32 %v293, %v302
      %v307 = vadd.f32 %v294, %v303
      %308 = vst [vmem:[%s251] sm:$0xff] %v304
      %309 = vst [vmem:[%s251 + $0x8] sm:$0xff] %v305
      %310 = vst [vmem:[%s251 + $0x10] sm:$0xff] %v306
      %311 = vst [vmem:[%s251 + $0x18] sm:$0xff] %v307
      %s312 = smul.u32 2, %s20
      %p313 = scmp.lt.s32.totalorder %s18, 1
      %s314 = scalar_select %p313, %s18, 1
      %p315 = scmp.lt.s32.totalorder %s312, 1
      %s316 = scalar_select %p315, %s312, 1
      %p317 = scmp.lt.s32.totalorder %s19, 0
      %s318 = scalar_select %p317, %s19, 0
      %s319 = smul.addr %s318, 2
      %s320 = smul.addr %s316, 2
      %s321 = sadd.s32 %s319, %s320
      %s322 = smul.addr %s314, 4
      %s323 = sadd.s32 %s321, %s322
      %s324 = smul.addr %s323, 8
      %s325 = scalar_lea.vmem %s2, %s324
      // Predicated region
      $region29: #{gridding_forward.1} parent=27 // pred_check
        %p326 = pneg %p112
      $region30: #{gridding_forward.1} parent=27 // pred_check_branch
        %328 = sbr.rel (%p326) target = $region32
      $region31: #{gridding_forward.1} parent=27 // pred_region
        %s329 = smul.u32 2, %s20
      $region32: #{gridding_forward.1} parent=27 // pred_fallthru
        _
    $region28: #{gridding_forward.1} parent=5 // pred_fallthru
      _
    %p330 = scmp.le.s32.totalorder 2, %s8
    // Predicated region
    $region33: #{gridding_forward.1} parent=5 // pred_check
      %p331 = pneg %p330
    $region34: #{gridding_forward.1} parent=5 // pred_check_branch
      %333 = sbr.rel (%p331) target = $region36
    $region35: #{gridding_forward.1} parent=5 // pred_region
      %s334 = ssub.s32 %s8, 2
      // Predicated region
      $region37: #{gridding_forward.1} parent=35 // pred_check
        %p335 = pneg %p118
      $region38: #{gridding_forward.1} parent=35 // pred_check_branch
        %337 = sbr.rel (%p335) target = $region40
      $region39: #{gridding_forward.1} parent=35 // pred_region
        %s338 = smul.u32 2, %s23
        %p339 = scmp.lt.s32.totalorder %s21, 1
        %s340 = scalar_select %p339, %s21, 1
        %p341 = scmp.lt.s32.totalorder %s338, 1
        %s342 = scalar_select %p341, %s338, 1
        %p343 = scmp.lt.s32.totalorder %s22, 0
        %s344 = scalar_select %p343, %s22, 0
        %s345 = smul.addr %s344, 2
        %s346 = smul.addr %s342, 2
        %s347 = sadd.s32 %s345, %s346
        %s348 = smul.addr %s340, 4
        %s349 = sadd.s32 %s347, %s348
        %s350 = smul.addr %s349, 8
        %s351 = scalar_lea.vmem %s2, %s350
      $region40: #{gridding_forward.1} parent=35 // pred_fallthru
        _
    $region36: #{gridding_forward.1} parent=5 // pred_fallthru
      _
  $region6: #{gridding_forward.1} parent=0 // loop_footer
    %s12 = sadd.s32 1, %s8
  $region7: #{gridding_forward.1} parent=0 // loop_footer_branch
    %7 = sbr.rel target = $region3
  $region8: #{gridding_forward.1} parent=0 // loop_exit
    _

</llo_original>
